<compile_context>
chip_gen: v5e
topology: v5e:2x2
jax: 0.10.0
libtpu: 0.0.40
codegen_flags: <defaults>
</compile_context>

<pallas_src>
import functools

import jax
import jax.numpy as jnp
import numpy as np
from jax.experimental import pallas as pl
from jax.experimental.pallas import tpu as pltpu

N_LAYERS = 3          # hidden Linear+BN+ReLU blocks (final block appended on top)
BN_EPS = 1e-5
LANE = 128
BF16_SUBLANE = 16     # bf16 min sublane tile is (16, 128)


def _round_up(n, m):
    return ((n + m - 1) // m) * m


def deepnet_kernel(x_ref, w_ref, v_ref, out_ref, h_ref, *, true_batch, eps):
    """One grid step == one (Linear -> BatchNorm1d(train stats) -> ReLU) block.

    x_ref:   (Bp, Dp)     bf16  zero-padded input activations (read at layer 0)
    w_ref:   (1, Dp, Dp)  bf16  this layer's pre-transposed, zero-padded weight
    v_ref:   (1, 2, Dp)   f32   rows = [gamma, beta], zero-padded
    out_ref: (Bp, Dp)     f32   written only at the last layer
    h_ref:   (Bp, Dp)     bf16  VMEM scratch carrying activations across layers
    """
    layer = pl.program_id(0)
    last = pl.num_programs(0) - 1

    @pl.when(layer == 0)
    def _():
        h_ref[...] = x_ref[...]

    h = h_ref[...]                       # (Bp, Dp) bf16
    bp = h.shape[0]
    inv_b = 1.0 / float(true_batch)

    # Linear on the MXU: bf16 operands, f32 accumulate.
    # Bias is omitted: training-mode BN's mean subtraction cancels it exactly.
    z = jnp.dot(h, w_ref[0], preferred_element_type=jnp.float32)

    if true_batch != bp:
        # Padded batch rows must not contaminate the BN statistics.
        row_ids = jax.lax.broadcasted_iota(jnp.int32, (bp, 1), 0)
        row_mask = (row_ids < true_batch).astype(jnp.float32)
    else:
        row_mask = None

    # BatchNorm1d (training mode), two-pass stats for numerical robustness.
    zs = z if row_mask is None else z * row_mask
    mean = jnp.sum(zs, axis=0, keepdims=True) * inv_b
    zc = z - mean
    zcs = zc if row_mask is None else zc * row_mask
    var = jnp.sum(zcs * zcs, axis=0, keepdims=True) * inv_b

    v = v_ref[0]                         # (2, Dp) f32
    gamma, beta = v[0:1, :], v[1:2, :]
    scale = gamma * jax.lax.rsqrt(var + eps)   # EUP rsqrt (free slot)
    shift = beta - mean * scale

    # BN + ReLU: one mul, one add, one max per element (filler under the MXU).
    h_new = jnp.maximum(z * scale + shift, 0.0)          # f32
    h_ref[...] = h_new.astype(jnp.bfloat16)               # bf16 carry

    @pl.when(layer == last)
    def _():
        out_ref[...] = h_new             # lane-dense (Dp multiple of 128) store


@jax.jit
def deepnet_forward(x, params):
    """params: list of (W[in,out], b[out], gamma[out], beta[out]) per block."""
    batch, n_input = x.shape
    n_blocks = len(params)
    n_output = params[-1][0].shape[1]

    # Common padded feature width (lane-dense) so all weights stack into one
    # slab and every store is an unmasked full-lane write.
    dims = [n_input] + [w.shape[1] for (w, _, _, _) in params]
    dp = _round_up(max(dims), LANE)
    # Batch padded to the bf16 sublane tile so the MXU LHS is fully packed.
    bp = _round_up(batch, BF16_SUBLANE)

    xp = jnp.zeros((bp, dp), jnp.bfloat16).at[:batch, :n_input].set(
        x.astype(jnp.bfloat16))

    w_stack = jnp.zeros((n_blocks, dp, dp), jnp.float32)
    v_stack = jnp.zeros((n_blocks, 2, dp), jnp.float32)
    for i, (w, b, g, be) in enumerate(params):
        d_in, d_out = w.shape
        w_stack = w_stack.at[i, :d_in, :d_out].set(w.astype(jnp.float32))
        # Linear bias intentionally NOT packed: cancelled by training-mode BN.
        v_stack = v_stack.at[i, 0, :d_out].set(g.astype(jnp.float32))
        v_stack = v_stack.at[i, 1, :d_out].set(be.astype(jnp.float32))
    # bf16 weights: MXU-native operands and half the weight DMA bytes.
    w_stack = w_stack.astype(jnp.bfloat16)

    kernel = functools.partial(deepnet_kernel, true_batch=batch, eps=BN_EPS)

    out_bytes = bp * dp * 4
    bytes_accessed = xp.size * 2 + w_stack.size * 2 + v_stack.size * 4 + out_bytes
    cost = pl.CostEstimate(
        flops=2 * bp * dp * dp * n_blocks,
        transcendentals=n_blocks * dp,
        bytes_accessed=bytes_accessed)

    # Actual resident VMEM: double-buffered weight / [gamma;beta] blocks,
    # the (resident) x and out blocks, and the bf16 activation carry.
    resident = (2 * dp * dp * 2          # weight block x2 buffers (bf16)
                + 2 * 2 * dp * 4         # [gamma;beta] block x2 buffers (f32)
                + 2 * bp * dp * 2        # x block (bf16), conservatively x2
                + 2 * bp * dp * 4        # out block (f32), conservatively x2
                + bp * dp * 2)           # h carry scratch (bf16)
    vmem_limit = int(min(48 << 20, max(16 << 20, 2 * resident + (4 << 20))))

    grid_spec = pltpu.PrefetchScalarGridSpec(
        num_scalar_prefetch=0,
        grid=(n_blocks,),
        in_specs=[
            pl.BlockSpec((bp, dp), lambda l: (0, 0)),        # x (resident)
            pl.BlockSpec((1, dp, dp), lambda l: (l, 0, 0)),  # per-layer weight
            pl.BlockSpec((1, 2, dp), lambda l: (l, 0, 0)),   # per-layer gamma/beta
        ],
        out_specs=pl.BlockSpec((bp, dp), lambda l: (0, 0)),  # resident accumulator
        scratch_shapes=[pltpu.VMEM((bp, dp), jnp.bfloat16)],  # activation carry
    )

    out = pl.pallas_call(
        kernel,
        out_shape=jax.ShapeDtypeStruct((bp, dp), jnp.float32),
        grid_spec=grid_spec,
        compiler_params=pltpu.CompilerParams(
            dimension_semantics=("arbitrary",),   # sequential layer carry
            vmem_limit_bytes=vmem_limit),
        cost_estimate=cost,
    )(xp, w_stack, v_stack)

    return out[:batch, :n_output]


def init_params(key, n_input, n_output, n_hidden, n_layers=N_LAYERS):
    """Deterministic synthetic parameters matching DeepNet.__init__ shapes."""
    params = []
    dims_in = [n_input] + [n_hidden] * (n_layers - 1) + [n_hidden]
    dims_out = [n_hidden] * n_layers + [n_output]
    for d_in, d_out in zip(dims_in, dims_out):
        key, kw, kb = jax.random.split(key, 3)
        # Weight stored as (in, out) == transpose of torch's Linear.weight.
        w = jax.random.normal(kw, (d_in, d_out), jnp.float32) * (1.0 / np.sqrt(d_in))
        b = jax.random.normal(kb, (d_out,), jnp.float32) * 0.01
        gamma = jnp.ones((d_out,), jnp.float32)
        beta = jnp.zeros((d_out,), jnp.float32)
        params.append((w, b, gamma, beta))
    return params


def deepnet_reference(x, params, matmul_dtype=jnp.bfloat16):
    """Pure-JAX reference: PyTorch-faithful two-pass BatchNorm in f32; matmul
    operands cast to `matmul_dtype` to match the kernel's MXU precision."""
    h = x.astype(jnp.float32)
    for (w, b, g, be) in params:
        z = jnp.dot(h.astype(matmul_dtype), w.astype(matmul_dtype),
                    preferred_element_type=jnp.float32) + b
        mean = jnp.mean(z, axis=0, keepdims=True)
        var = jnp.mean((z - mean) ** 2, axis=0, keepdims=True)
        h = jnp.maximum((z - mean) * jax.lax.rsqrt(var + BN_EPS) * g + be, 0.0)
    return h


if __name__ == "__main__":
    # Small shapes consistent with the module: x is (batch, n_input).
    batch, n_input, n_hidden, n_output = 8, 32, 128, 16

    key = jax.random.PRNGKey(0)
    key_x, key_p = jax.random.split(key)
    x = jax.random.normal(key_x, (batch, n_input), jnp.float32)
    params = init_params(key_p, n_input, n_output, n_hidden)

    out = deepnet_forward(x, params)
    out = jax.block_until_ready(out)

    ref = deepnet_reference(x, params)
    # Tolerance covers accumulation-order differences of the bf16-operand /
    # f32-accumulate dot and the dropped (algebraically cancelled) bias.
    np.testing.assert_allclose(np.asarray(out), np.asarray(ref),
                               rtol=2e-3, atol=2e-3)

    print("KERNEL_OK")
</pallas_src>

<mosaic_0001>
module attributes {stable_mosaic.version = 11 : i64} {
  func.func @deepnet_kernel(%arg0: i32, %arg1: memref<16x128xbf16, #tpu.memory_space<vmem>>, %arg2: memref<1x128x128xbf16, #tpu.memory_space<vmem>>, %arg3: memref<1x2x128xf32, #tpu.memory_space<vmem>>, %arg4: memref<16x128xf32, #tpu.memory_space<vmem>>, %arg5: memref<16x128xbf16, #tpu.memory_space<vmem>>) attributes {dimension_semantics = [#tpu.dimension_semantics<arbitrary>], iteration_bounds = array<i64: 4>, scalar_prefetch = 0 : i64, scratch_operands = 1 : i64, tpu.core_type = #tpu.core_type<tc>, window_params = [{pipeline_mode = #tpu.pipeline_mode<synchronous>, transform_indices = @transform_0, window_bounds = array<i64: 16, 128>}, {transform_indices = @transform_1, window_bounds = array<i64: 1, 128, 128>}, {transform_indices = @transform_2, window_bounds = array<i64: 1, 2, 128>}, {pipeline_mode = #tpu.pipeline_mode<synchronous>, transform_indices = @transform_3, window_bounds = array<i64: 16, 128>}]} {
    %c0_i32 = arith.constant 0 : i32
    %0 = arith.cmpi eq, %arg0, %c0_i32 : i32
    %1 = arith.extui %0 : i1 to i32
    %c0_i32_0 = arith.constant 0 : i32
    %2 = arith.cmpi ne, %1, %c0_i32_0 : i32
    scf.if %2 {
      %c0_17 = arith.constant 0 : index
      %c0_18 = arith.constant 0 : index
      %48 = vector.load %arg1[%c0_17, %c0_18] : memref<16x128xbf16, #tpu.memory_space<vmem>>, vector<16x128xbf16>
      %c0_19 = arith.constant 0 : index
      %c0_20 = arith.constant 0 : index
      %49 = vector.load %arg5[%c0_19, %c0_20] : memref<16x128xbf16, #tpu.memory_space<vmem>>, vector<16x128xbf16>
      tpu.vector_store %arg5[%c0_19, %c0_20], %48 {strides = array<i32>} : memref<16x128xbf16, #tpu.memory_space<vmem>>, vector<16x128xbf16>,
    } else {
    }
    %c0 = arith.constant 0 : index
    %c0_1 = arith.constant 0 : index
    %3 = vector.load %arg5[%c0, %c0_1] : memref<16x128xbf16, #tpu.memory_space<vmem>>, vector<16x128xbf16>
    %c0_2 = arith.constant 0 : index
    %c0_3 = arith.constant 0 : index
    %c0_4 = arith.constant 0 : index
    %4 = vector.load %arg2[%c0_2, %c0_3, %c0_4] : memref<1x128x128xbf16, #tpu.memory_space<vmem>>, vector<1x128x128xbf16>
    %5 = vector.shape_cast %4 : vector<1x128x128xbf16> to vector<128x128xbf16>
    %cst = arith.constant dense<0.000000e+00> : vector<16x128xf32>
    %6 = tpu.matmul %3, %5, %cst {dimension_numbers = #tpu.dot_dimension_numbers<[1], [0], [0], [1], [0, 0, 1, 1], [], []>} : vector<16x128xbf16>, vector<128x128xbf16>, vector<16x128xf32> -> vector<16x128xf32>
    %7 = tpu.iota {dimensions = array<i32: 0>} : vector<16x1xi32>
    %c8_i32 = arith.constant 8 : i32
    %8 = vector.broadcast %c8_i32 : i32 to vector<16x1xi32>
    %9 = arith.cmpi slt, %7, %8 : vector<16x1xi32>
    %10 = arith.extui %9 : vector<16x1xi1> to vector<16x1xi32>
    %11 = arith.sitofp %10 : vector<16x1xi32> to vector<16x1xf32>
    %12 = vector.broadcast %11 : vector<16x1xf32> to vector<16x128xf32>
    %13 = arith.mulf %6, %12 : vector<16x128xf32>
    %cst_5 = arith.constant dense<0.000000e+00> : vector<128xf32>
    %14 = vector.multi_reduction <add>, %13, %cst_5 [0] : vector<16x128xf32> to vector<128xf32>
    %15 = vector.shape_cast %14 : vector<128xf32> to vector<1x128xf32>
    %cst_6 = arith.constant 1.250000e-01 : f32
    %16 = vector.broadcast %cst_6 : f32 to vector<1x128xf32>
    %17 = arith.mulf %15, %16 : vector<1x128xf32>
    %18 = vector.broadcast %17 : vector<1x128xf32> to vector<16x128xf32>
    %19 = arith.subf %6, %18 : vector<16x128xf32>
    %20 = vector.broadcast %11 : vector<16x1xf32> to vector<16x128xf32>
    %21 = arith.mulf %19, %20 : vector<16x128xf32>
    %22 = arith.mulf %21, %21 : vector<16x128xf32>
    %cst_7 = arith.constant dense<0.000000e+00> : vector<128xf32>
    %23 = vector.multi_reduction <add>, %22, %cst_7 [0] : vector<16x128xf32> to vector<128xf32>
    %24 = vector.shape_cast %23 : vector<128xf32> to vector<1x128xf32>
    %cst_8 = arith.constant 1.250000e-01 : f32
    %25 = vector.broadcast %cst_8 : f32 to vector<1x128xf32>
    %26 = arith.mulf %24, %25 : vector<1x128xf32>
    %c0_9 = arith.constant 0 : index
    %c0_10 = arith.constant 0 : index
    %c0_11 = arith.constant 0 : index
    %27 = vector.load %arg3[%c0_9, %c0_10, %c0_11] : memref<1x2x128xf32, #tpu.memory_space<vmem>>, vector<1x2x128xf32>
    %28 = vector.shape_cast %27 : vector<1x2x128xf32> to vector<2x128xf32>
    %29 = vector.extract_strided_slice %28 {offsets = [0, 0], sizes = [1, 128], strides = [1, 1]} : vector<2x128xf32> to vector<1x128xf32>
    %30 = vector.extract_strided_slice %28 {offsets = [1, 0], sizes = [1, 128], strides = [1, 1]} : vector<2x128xf32> to vector<1x128xf32>
    %cst_12 = arith.constant 9.99999974E-6 : f32
    %31 = vector.broadcast %cst_12 : f32 to vector<1x128xf32>
    %32 = arith.addf %26, %31 : vector<1x128xf32>
    %33 = math.rsqrt %32 : vector<1x128xf32>
    %34 = arith.mulf %29, %33 : vector<1x128xf32>
    %35 = arith.mulf %17, %34 : vector<1x128xf32>
    %36 = arith.subf %30, %35 : vector<1x128xf32>
    %37 = vector.broadcast %34 : vector<1x128xf32> to vector<16x128xf32>
    %38 = arith.mulf %6, %37 : vector<16x128xf32>
    %39 = vector.broadcast %36 : vector<1x128xf32> to vector<16x128xf32>
    %40 = arith.addf %38, %39 : vector<16x128xf32>
    %cst_13 = arith.constant 0.000000e+00 : f32
    %41 = vector.broadcast %cst_13 : f32 to vector<16x128xf32>
    %42 = arith.maximumf %40, %41 : vector<16x128xf32>
    %43 = arith.truncf %42 : vector<16x128xf32> to vector<16x128xbf16>
    %c0_14 = arith.constant 0 : index
    %c0_15 = arith.constant 0 : index
    %44 = vector.load %arg5[%c0_14, %c0_15] : memref<16x128xbf16, #tpu.memory_space<vmem>>, vector<16x128xbf16>
    tpu.vector_store %arg5[%c0_14, %c0_15], %43 {strides = array<i32>} : memref<16x128xbf16, #tpu.memory_space<vmem>>, vector<16x128xbf16>,
    %c3_i32 = arith.constant 3 : i32
    %45 = arith.cmpi eq, %arg0, %c3_i32 : i32
    %46 = arith.extui %45 : i1 to i32
    %c0_i32_16 = arith.constant 0 : i32
    %47 = arith.cmpi ne, %46, %c0_i32_16 : i32
    scf.if %47 {
      %c0_17 = arith.constant 0 : index
      %c0_18 = arith.constant 0 : index
      %48 = vector.load %arg4[%c0_17, %c0_18] : memref<16x128xf32, #tpu.memory_space<vmem>>, vector<16x128xf32>
      tpu.vector_store %arg4[%c0_17, %c0_18], %42 {strides = array<i32>} : memref<16x128xf32, #tpu.memory_space<vmem>>, vector<16x128xf32>,
    } else {
    }
    return
  }
  func.func @transform_0(%arg0: i32) -> (i32, i32) {
    %c0_i32 = arith.constant 0 : i32
    %c0_i32_0 = arith.constant 0 : i32
    %c0_i32_1 = arith.constant 0 : i32
    return %c0_i32, %c0_i32_0 : i32, i32
  }
  func.func @transform_1(%arg0: i32) -> (i32, i32, i32) {
    %c0_i32 = arith.constant 0 : i32
    %c0_i32_0 = arith.constant 0 : i32
    %c0_i32_1 = arith.constant 0 : i32
    return %arg0, %c0_i32, %c0_i32_0 : i32, i32, i32
  }
  func.func @transform_2(%arg0: i32) -> (i32, i32, i32) {
    %c0_i32 = arith.constant 0 : i32
    %c0_i32_0 = arith.constant 0 : i32
    %c0_i32_1 = arith.constant 0 : i32
    return %arg0, %c0_i32, %c0_i32_0 : i32, i32, i32
  }
  func.func @transform_3(%arg0: i32) -> (i32, i32) {
    %c0_i32 = arith.constant 0 : i32
    %c0_i32_0 = arith.constant 0 : i32
    %c0_i32_1 = arith.constant 0 : i32
    return %c0_i32, %c0_i32_0 : i32, i32
  }
}

</mosaic_0001>

<llo_original>
// kernel: deepnet_forward.1
$region0: #{deepnet_forward.1}
  #allocation0 [shape = 'u32[]', space=smem, size = 0x4, offset = 0x4, fixed_abs, tag = 'smem constant byte address 0x4 - core index']
  #allocation1 [shape = 'u32[72,128]{1,0:T(1,128)}', space=vmem, size = 0x9000, scoped, tag = 'internal scratch']
  #allocation2 [shape = 'bf16[16,128]{1,0:T(8,128)(2,1)}', space=vmem, size = 0x1000, scoped, tag = 'scratch operand']
  %s0 = inlined_call_operand.vmem [shape: bf16[16,128], index: 0, kind: input, shape index: {}]
  %s1 = inlined_call_operand.vmem [shape: bf16[4,128,128], index: 1, kind: input, shape index: {}]
  %s2 = inlined_call_operand.vmem [shape: f32[4,2,128], index: 2, kind: input, shape index: {}]
  %s3 = inlined_call_operand.vmem [shape: f32[16,128], index: 3, kind: output, shape index: {}]
  %s4 = sld [smem:[#allocation0]]
  $region53: #{deepnet_forward.1} parent=0
    _
  %s6 = ssub.s32 1, %s4
  %s7 = scalar_select 0, %s6, %s4
  loop: start=0, step=1, limit=6
  $region2: #{deepnet_forward.1} parent=0 // loop_pre_header
    _
  $region3: #{deepnet_forward.1} parent=0 // loop_header
    %s9 = sphi 0, %s13
    %p10 = scmp.ge.s32.totalorder %s9, 6
    %s17 = sphi 0, %s17
    %s19 = sphi 0, %s17
    %s20 = sphi 0, %s19
    %s34 = sphi 0, %s20
    %s40 = sphi 0, %s42
    %s43 = sphi 0, %s40
    %s44 = sphi 0, %s43
    %s60 = sphi 0, %s44
    %s66 = sphi 0, %s68
    %s69 = sphi 0, %s66
    %s70 = sphi 0, %s69
    %s86 = sphi 0, %s70
    %s90 = sphi 0, %s90
    %s92 = sphi 0, %s90
    %s93 = sphi 0, %s92
    %s107 = sphi 0, %s93
  $region4: #{deepnet_forward.1} parent=0 // loop_header_branch
    %12 = sbr.rel (%p10) target = $region8
  $region5: #{deepnet_forward.1} parent=0 // loop_body
    %s14 = ssub.s32 %s9, 1
    %s15 = ssub.s32 %s9, 2
    %s16 = sadd.s32 %s9, 1
    %s18 = sadd.s32 %s17, 1
    %p21 = scmp.eq.s32.totalorder %s9, 3
    %p22 = scmp.ne.s32.totalorder %s17, %s19
    %p23 = scmp.eq.s32.totalorder %s9, 0
    %p24 = por %p22, %p23
    %p25 = scmp.ne.s32.totalorder %s17, %s19
    %p26 = scmp.eq.s32.totalorder %s14, 3
    %p27 = por %p25, %p26
    %p28 = scmp.ne.s32.totalorder %s19, %s20
    %p29 = scmp.eq.s32.totalorder %s14, 0
    %p30 = por %p28, %p29
    %p31 = scmp.ne.s32.totalorder %s19, %s20
    %p32 = scmp.eq.s32.totalorder %s15, 3
    %p33 = por %p31, %p32
    %p35 = scmp.ne.s32.totalorder %s20, %s34
    %p36 = scmp.eq.s32.totalorder %s15, 0
    %p37 = por %p35, %p36
    %s38 = ssub.s32 %s9, %s16
    %p39 = scmp.eq.s32.totalorder %s38, 0
    %s41 = sadd.s32 %s40, 1
    %s42 = scalar_select %p39, %s40, %s41
    %p45 = pneg %p39
    %p46 = scmp.eq.s32.totalorder %s9, 3
    %p47 = por %p45, %p46
    %p48 = scmp.ne.s32.totalorder %s40, %s43
    %p49 = scmp.eq.s32.totalorder %s9, 0
    %p50 = por %p48, %p49
    %p51 = scmp.ne.s32.totalorder %s40, %s43
    %p52 = scmp.eq.s32.totalorder %s14, 3
    %p53 = por %p51, %p52
    %p54 = scmp.ne.s32.totalorder %s43, %s44
    %p55 = scmp.eq.s32.totalorder %s14, 0
    %p56 = por %p54, %p55
    %p57 = scmp.ne.s32.totalorder %s43, %s44
    %p58 = scmp.eq.s32.totalorder %s15, 3
    %p59 = por %p57, %p58
    %p61 = scmp.ne.s32.totalorder %s44, %s60
    %p62 = scmp.eq.s32.totalorder %s15, 0
    %p63 = por %p61, %p62
    %s64 = ssub.s32 %s9, %s16
    %p65 = scmp.eq.s32.totalorder %s64, 0
    %s67 = sadd.s32 %s66, 1
    %s68 = scalar_select %p65, %s66, %s67
    %p71 = pneg %p65
    %p72 = scmp.eq.s32.totalorder %s9, 3
    %p73 = por %p71, %p72
    %p74 = scmp.ne.s32.totalorder %s66, %s69
    %p75 = scmp.eq.s32.totalorder %s9, 0
    %p76 = por %p74, %p75
    %p77 = scmp.ne.s32.totalorder %s66, %s69
    %p78 = scmp.eq.s32.totalorder %s14, 3
    %p79 = por %p77, %p78
    %p80 = scmp.ne.s32.totalorder %s69, %s70
    %p81 = scmp.eq.s32.totalorder %s14, 0
    %p82 = por %p80, %p81
    %p83 = scmp.ne.s32.totalorder %s69, %s70
    %p84 = scmp.eq.s32.totalorder %s15, 3
    %p85 = por %p83, %p84
    %p87 = scmp.ne.s32.totalorder %s70, %s86
    %p88 = scmp.eq.s32.totalorder %s15, 0
    %p89 = por %p87, %p88
    %s91 = sadd.s32 %s90, 1
    %p94 = scmp.eq.s32.totalorder %s9, 3
    %p95 = scmp.ne.s32.totalorder %s90, %s92
    %p96 = scmp.eq.s32.totalorder %s9, 0
    %p97 = por %p95, %p96
    %p98 = scmp.ne.s32.totalorder %s90, %s92
    %p99 = scmp.eq.s32.totalorder %s14, 3
    %p100 = por %p98, %p99
    %p101 = scmp.ne.s32.totalorder %s92, %s93
    %p102 = scmp.eq.s32.totalorder %s14, 0
    %p103 = por %p101, %p102
    %p104 = scmp.ne.s32.totalorder %s92, %s93
    %p105 = scmp.eq.s32.totalorder %s15, 3
    %p106 = por %p104, %p105
    %p108 = scmp.ne.s32.totalorder %s93, %s107
    %p109 = scmp.eq.s32.totalorder %s15, 0
    %p110 = por %p108, %p109
    %p111 = scmp.le.s32.totalorder 1, %s9
    %p112 = scmp.lt.s32.totalorder %s9, 5
    %p113 = pnand %p111, %p112
    %p114 = pneg %p113
    // Predicated region
    $region9: #{deepnet_forward.1} parent=5 // pred_check
      _
    $region10: #{deepnet_forward.1} parent=5 // pred_check_branch
      %116 = sbr.rel (%p113) target = $region12
    $region11: #{deepnet_forward.1} parent=5 // pred_region
      %s117 = ssub.s32 %s9, 1
      // Predicated region
      $region13: #{deepnet_forward.1} parent=11 // pred_check
        %p118 = pneg %p30
      $region14: #{deepnet_forward.1} parent=11 // pred_check_branch
        %120 = sbr.rel (%p118) target = $region16
      $region15: #{deepnet_forward.1} parent=11 // pred_region
        _
      $region16: #{deepnet_forward.1} parent=11 // pred_fallthru
        _
    $region12: #{deepnet_forward.1} parent=5 // pred_fallthru
      _
    %p121 = scmp.lt.s32.totalorder %s9, 4
    // Predicated region
    $region17: #{deepnet_forward.1} parent=5 // pred_check
      %p122 = pneg %p121
    $region18: #{deepnet_forward.1} parent=5 // pred_check_branch
      %124 = sbr.rel (%p122) target = $region20
    $region19: #{deepnet_forward.1} parent=5 // pred_region
      // Predicated region
      $region21: #{deepnet_forward.1} parent=19 // pred_check
        %p125 = pneg %p50
      $region22: #{deepnet_forward.1} parent=19 // pred_check_branch
        %127 = sbr.rel (%p125) target = $region24
      $region23: #{deepnet_forward.1} parent=19 // pred_region
        %p128 = scmp.lt.s32.totalorder %s9, 3
        %s129 = scalar_select %p128, %s9, 3
        %s130 = smul.addr %s129, 16
        %s131 = smul.addr %s130, 4
        %s132 = scalar_lea.vmem %s1, %s131
      $region24: #{deepnet_forward.1} parent=19 // pred_fallthru
        _
      // Predicated region
      $region25: #{deepnet_forward.1} parent=19 // pred_check
        %p133 = pneg %p76
      $region26: #{deepnet_forward.1} parent=19 // pred_check_branch
        %135 = sbr.rel (%p133) target = $region28
      $region27: #{deepnet_forward.1} parent=19 // pred_region
        %p136 = scmp.lt.s32.totalorder %s9, 3
        %s137 = scalar_select %p136, %s9, 3
        %s138 = smul.addr %s137, 2
        %s139 = scalar_lea.vmem %s2, %s138
      $region28: #{deepnet_forward.1} parent=19 // pred_fallthru
        _
    $region20: #{deepnet_forward.1} parent=5 // pred_fallthru
      _
    %p140 = scmp.le.s32.totalorder 1, %s9
    %p141 = scmp.lt.s32.totalorder %s9, 5
    %p142 = pnand %p140, %p141
    %p143 = pneg %p142
    // Predicated region
    $region29: #{deepnet_forward.1} parent=5 // pred_check
      _
    $region30: #{deepnet_forward.1} parent=5 // pred_check_branch
      %145 = sbr.rel (%p142) target = $region32
    $region31: #{deepnet_forward.1} parent=5 // pred_region
      %s146 = ssub.s32 %s9, 1
      %p147 = pneg %p30
      %p148 = pneg %p27
      %p149 = scmp.lt.s32.totalorder %s14, 3
      %s150 = scalar_select %p149, %s14, 3
      %s151 = smul.addr %s150, 16
      %s152 = smul.addr %s151, 4
      %s153 = scalar_lea.vmem %s1, %s152
      %p154 = pneg %p56
      %p155 = pneg %p53
      %p156 = scmp.lt.s32.totalorder %s14, 3
      %s157 = scalar_select %p156, %s14, 3
      %s158 = smul.addr %s157, 2
      %s159 = scalar_lea.vmem %s2, %s158
      %p160 = pneg %p82
      %p161 = pneg %p79
      %p162 = pneg %p103
      %p163 = pneg %p100
      %p164 = scmp.lt.s32.totalorder %s14, 3
      %s165 = scalar_select %p164, %s14, 3
      %s166 = smul.addr %s165, 16
      %s167 = smul.addr %s166, 4
      %s168 = scalar_lea.vmem %s1, %s167
      %p169 = scmp.lt.s32.totalorder %s14, 3
      %s170 = scalar_select %p169, %s14, 3
      %s171 = smul.addr %s170, 2
      %s172 = scalar_lea.vmem %s2, %s171
      %p173 = scmp.eq.s32.totalorder %s14, 0
      // Predicated region
      $region33: #{deepnet_forward.1} parent=31 // pred_check
        %p174 = pneg %p173
      $region34: #{deepnet_forward.1} parent=31 // pred_check_branch
        %176 = sbr.rel (%p174) target = $region36
      $region35: #{deepnet_forward.1} parent=31 // pred_region
        %v177 = vld [vmem:[%s0] sm:$0xf]
        %v178 = vld [vmem:[%s0 + $0x4] sm:$0xf]
        %179 = vst [vmem:[#allocation2] sm:$0xf] %v177
        %180 = vst [vmem:[#allocation2 + $0x4] sm:$0xf] %v178
      $region36: #{deepnet_forward.1} parent=31 // pred_fallthru
        _
      %v181 = vld [vmem:[#allocation2] sm:$0xf]
      %v182 = vld [vmem:[#allocation2 + $0x4] sm:$0xf]
      %v183 = vld [vmem:[%s168] sm:$0xf]
      %v184 = vld [vmem:[%s168 + $0x4] sm:$0xf]
      %v185 = vld [vmem:[%s168 + $0x8] sm:$0xf]
      %v186 = vld [vmem:[%s168 + $0xc] sm:$0xf]
      %v187 = vld [vmem:[%s168 + $0x10] sm:$0xf]
      %v188 = vld [vmem:[%s168 + $0x14] sm:$0xf]
      %v189 = vld [vmem:[%s168 + $0x18] sm:$0xf]
      %v190 = vld [vmem:[%s168 + $0x1c] sm:$0xf]
      %v191 = vld [vmem:[%s168 + $0x20] sm:$0xf]
      %v192 = vld [vmem:[%s168 + $0x24] sm:$0xf]
      %v193 = vld [vmem:[%s168 + $0x28] sm:$0xf]
      %v194 = vld [vmem:[%s168 + $0x2c] sm:$0xf]
      %v195 = vld [vmem:[%s168 + $0x30] sm:$0xf]
      %v196 = vld [vmem:[%s168 + $0x34] sm:$0xf]
      %v197 = vld [vmem:[%s168 + $0x38] sm:$0xf]
      %v198 = vld [vmem:[%s168 + $0x3c] sm:$0xf]
      %v201 = vunpack.c.l.b16 %v181
      %v202 = vunpack.c.l.b16 %v182
      %v203 = vpack.c.b16 %v202, %v201
      %v221 = vunpack.c.l.b16 %v183
      %v222 = vunpack.c.l.b16 %v184
      %v223 = vunpack.c.l.b16 %v185
      %v224 = vunpack.c.l.b16 %v186
      %v225 = vunpack.c.l.b16 %v187
      %v226 = vunpack.c.l.b16 %v188
      %v227 = vunpack.c.l.b16 %v189
      %v228 = vunpack.c.l.b16 %v190
      %v229 = vunpack.c.l.b16 %v191
      %v230 = vunpack.c.l.b16 %v192
      %v231 = vunpack.c.l.b16 %v193
      %v232 = vunpack.c.l.b16 %v194
      %v233 = vunpack.c.l.b16 %v195
      %v234 = vunpack.c.l.b16 %v196
      %v235 = vunpack.c.l.b16 %v197
      %v236 = vunpack.c.l.b16 %v198
      %v237 = vpack.c.b16 %v222, %v221
      %v238 = vpack.c.b16 %v224, %v223
      %v239 = vpack.c.b16 %v226, %v225
      %v240 = vpack.c.b16 %v228, %v227
      %v241 = vpack.c.b16 %v230, %v229
      %v242 = vpack.c.b16 %v232, %v231
      %v243 = vpack.c.b16 %v234, %v233
      %v244 = vpack.c.b16 %v236, %v235
      %253 = vmatpush.bf16.msra.mxu0 %v244
      %254 = vmatpush.bf16.msra.mxu0 %v243
      %255 = vmatpush.bf16.msra.mxu0 %v242
      %256 = vmatpush.bf16.msra.mxu0 %v241
      %257 = vmatpush.bf16.msra.mxu0 %v240
      %258 = vmatpush.bf16.msra.mxu0 %v239
      %259 = vmatpush.bf16.msra.mxu0 %v238
      %260 = vmatpush.bf16.msra.mxu0 %v237
      %261 = vmatmul.bf16.gmra.mxu0 %v203
      %v262 = vpop.f32.mrf.mxu0
      %v263 = vadd.f32 0.0, %v262
      %v264 = vpop.f32.mrf.mxu0
      %v265 = vadd.f32 0.0, %v264
      %266 = vdwg.mxu0
      %v267 = vlaneseq
      %v268 = vshrl.u32 %v267, 7
      %v269 = vadd.s32 %v268, 8
      %vm270 = vcmp.lt.s32.totalorder %v268, 8
      %vm271 = vcmp.lt.s32.totalorder %v269, 8
      %v272 = vsel %vm270, 1, 0
      %v273 = vsel %vm271, 1, 0
      %v274 = vcvt.s32.f32 %v272
      %v275 = vcvt.s32.f32 %v273
      %v276 = vmul.f32 %v263, %v274
      %v277 = vmul.f32 %v265, %v275
      %v278 = vadd.f32 %v276, %v277
      %v279 = vrot.slane %v278, 4
      %v280 = vadd.f32 %v278, %v279
      %v281 = vrot.slane %v280, 2
      %v282 = vadd.f32 %v280, %v281
      %v283 = vrot.slane %v282, 1
      %v284 = vadd.f32 %v282, %v283
      %v285 = vmul.f32 %v284, 0.125
      %v286 = vsub.f32 %v263, %v285
      %v287 = vsub.f32 %v265, %v285
      %v288 = vmul.f32 %v286, %v274
      %v289 = vmul.f32 %v287, %v275
      %v290 = vmul.f32 %v288, %v288
      %v291 = vmul.f32 %v289, %v289
      %v292 = vadd.f32 %v290, %v291
      %v293 = vrot.slane %v292, 4
      %v294 = vadd.f32 %v292, %v293
      %v295 = vrot.slane %v294, 2
      %v296 = vadd.f32 %v294, %v295
      %v297 = vrot.slane %v296, 1
      %v298 = vadd.f32 %v296, %v297
      %v299 = vmul.f32 %v298, 0.125
      %v300 = vld [vmem:[%s172] sm:$0x3]
      %v301 = vadd.f32 %v299, 1e-05
      %v302 = vrsqrt.pop %v301
      %v303 = vmul.f32 %v302, %v301
      %v304 = vmul.f32 %v303, %v302
      %v305 = vmul.f32 0.5, %v304
      %v306 = vsub.f32 1.5, %v305
      %v307 = vmul.f32 %v302, %v306
      %vm308 = vweird.f32 %v301
      %vm309 = vweird.f32 %v302
      %vm310 = vmor %vm308, %vm309
      %v311 = vsel %vm310, %v302, %v307
      %v312 = vmul.f32 %v300, %v311
      %v313 = vmul.f32 %v285, %v312
      %v315 = vrot.slane %v313, 7
      %v317 = vsub.f32 %v300, %v315
      %v318 = vperm.slane %v312, 0
      %v319 = vmul.f32 %v263, %v318
      %v320 = vmul.f32 %v265, %v318
      %v321 = vperm.slane %v317, 1
      %v322 = vadd.f32 %v319, %v321
      %v323 = vadd.f32 %v320, %v321
      %v324 = vmax.f32 %v322, 0.0
      %v325 = vmax.f32 %v323, 0.0
      %v326 = vpack.c.bf16 %v324, %v324
      %v327 = vpack.c.bf16 %v325, %v325
      %328 = vst [vmem:[#allocation2] sm:$0xf] %v326
      %329 = vst [vmem:[#allocation2 + $0x4] sm:$0xf] %v327
      %p330 = scmp.eq.s32.totalorder %s14, 3
      // Predicated region
      $region37: #{deepnet_forward.1} parent=31 // pred_check
        %p331 = pneg %p330
      $region38: #{deepnet_forward.1} parent=31 // pred_check_branch
        %333 = sbr.rel (%p331) target = $region40
      $region39: #{deepnet_forward.1} parent=31 // pred_region
        %334 = vst [vmem:[%s3] sm:$0xff] %v324
        %335 = vst [vmem:[%s3 + $0x8] sm:$0xff] %v325
      $region40: #{deepnet_forward.1} parent=31 // pred_fallthru
        _
      // Predicated region
      $region41: #{deepnet_forward.1} parent=31 // pred_check
        %p336 = pneg %p100
      $region42: #{deepnet_forward.1} parent=31 // pred_check_branch
        %338 = sbr.rel (%p336) target = $region44
      $region43: #{deepnet_forward.1} parent=31 // pred_region
        _
      $region44: #{deepnet_forward.1} parent=31 // pred_fallthru
        _
      // Predicated region
      $region45: #{deepnet_forward.1} parent=31 // pred_check
        %p339 = pneg %p100
      $region46: #{deepnet_forward.1} parent=31 // pred_check_branch
        %341 = sbr.rel (%p339) target = $region48
      $region47: #{deepnet_forward.1} parent=31 // pred_region
        _
      $region48: #{deepnet_forward.1} parent=31 // pred_fallthru
        _
    $region32: #{deepnet_forward.1} parent=5 // pred_fallthru
      _
    %p342 = scmp.le.s32.totalorder 2, %s9
    // Predicated region
    $region49: #{deepnet_forward.1} parent=5 // pred_check
      %p343 = pneg %p342
    $region50: #{deepnet_forward.1} parent=5 // pred_check_branch
      %345 = sbr.rel (%p343) target = $region52
    $region51: #{deepnet_forward.1} parent=5 // pred_region
      %s346 = ssub.s32 %s9, 2
    $region52: #{deepnet_forward.1} parent=5 // pred_fallthru
      _
  $region6: #{deepnet_forward.1} parent=0 // loop_footer
    %s13 = sadd.s32 1, %s9
  $region7: #{deepnet_forward.1} parent=0 // loop_footer_branch
    %8 = sbr.rel target = $region3
  $region8: #{deepnet_forward.1} parent=0 // loop_exit
    _

</llo_original>
